<compile_context>
chip_gen: v7x
topology: tpu7x:2x2x1
jax: 0.10.0
libtpu: 0.0.40
codegen_flags: <defaults>
</compile_context>

<pallas_src>
import math

import jax
import jax.numpy as jnp
from jax.experimental import pallas as pl
from jax.experimental.pallas import tpu as pltpu


def _round_up(n, m):
    return ((n + m - 1) // m) * m


def _mlp_kernel(x_ref, w1_ref, b1_ref, w2_ref, b2_ref, w3_ref, b3_ref, o_ref):
    x = x_ref[...]          # (4, tn)   batch on lanes
    w1 = w1_ref[...]        # (l1, 4)

    # ---- Layer 1: 4 broadcast FMAs on the VPU (K=4 would waste >=32x MXU depth) ----
    acc = w1[:, 0:1] * x[0:1, :]                      # (l1, tn)
    for k in range(1, 4):
        acc = acc + w1[:, k:k + 1] * x[k:k + 1, :]
    h1 = jnp.maximum(acc + b1_ref[...], 0.0)          # (l1, tn)

    # ---- Layer 2: real contraction (K=l1) on the MXU ----
    h2 = jnp.dot(w2_ref[...], h1, preferred_element_type=jnp.float32) + b2_ref[...]
    h2 = jnp.maximum(h2, 0.0)                         # (l2, tn)

    # ---- Layer 3: single output unit -> VPU mul + XLU sublane reduce (no N=1 matmul) ----
    out = jnp.sum(h2 * w3_ref[...], axis=0, keepdims=True) + b3_ref[...]   # (1, tn)
    o_ref[...] = out.astype(o_ref.dtype)


def net2_forward(x, params, *, tn=512):
    """x: [B, 4] float32.

    params (feature-major layout):
      w1 [l1, 4], b1 [l1, 1], w2 [l2, l1], b2 [l2, 1], w3 [l2, 1], b3 [1, 1].
    Returns [B, 1] float32.
    """
    B, F = x.shape
    assert F == 4
    assert tn % 128 == 0 and tn >= 128

    w1, b1 = params["w1"], params["b1"]
    w2, b2 = params["w2"], params["b2"]
    w3, b3 = params["w3"], params["b3"]
    l1 = w1.shape[0]
    l2 = w2.shape[0]

    # Pad the batch up to a lane-friendly multiple; small B collapses to a single block.
    tn_eff = min(tn, _round_up(B, 128))
    Bp = _round_up(B, tn_eff)
    xt = jnp.pad(x.T, ((0, 0), (0, Bp - B)))          # (4, Bp), zero-padded tail

    grid = (Bp // tn_eff,)
    full = lambda shape: pl.BlockSpec(shape, lambda i: (0, 0))

    out = pl.pallas_call(
        _mlp_kernel,
        out_shape=jax.ShapeDtypeStruct((1, Bp), jnp.float32),
        grid_spec=pltpu.PrefetchScalarGridSpec(
            num_scalar_prefetch=0,
            grid=grid,
            in_specs=[
                pl.BlockSpec((F, tn_eff), lambda i: (0, i)),   # x tile (batch on lanes)
                full((l1, F)), full((l1, 1)),                  # layer 1
                full((l2, l1)), full((l2, 1)),                 # layer 2
                full((l2, 1)), full((1, 1)),                   # layer 3
            ],
            out_specs=pl.BlockSpec((1, tn_eff), lambda i: (0, i)),  # lane-dense output
        ),
        compiler_params=pltpu.CompilerParams(
            dimension_semantics=("parallel",),
        ),
    )(xt, w1, b1, w2, b2, w3, b3)

    return out[0, :B].reshape(B, 1)


def init_params(key, l1, l2):
    """PyTorch nn.Linear default init (U[-1/sqrt(fan_in), +1/sqrt(fan_in)]).

    Weights stored PyTorch-style [out_features, in_features]; biases as column vectors."""
    keys = jax.random.split(key, 6)

    def lin(kw, kb, fan_in, fan_out):
        bound = 1.0 / math.sqrt(fan_in)
        w = jax.random.uniform(kw, (fan_out, fan_in), jnp.float32, -bound, bound)
        b = jax.random.uniform(kb, (fan_out, 1), jnp.float32, -bound, bound)
        return w, b

    w1, b1 = lin(keys[0], keys[1], 4, l1)
    w2, b2 = lin(keys[2], keys[3], l1, l2)
    w3_row, b3 = lin(keys[4], keys[5], l2, 1)           # PyTorch shape [1, l2]
    return {"w1": w1, "b1": b1, "w2": w2, "b2": b2,
            "w3": w3_row.T,                              # stored as column [l2, 1]
            "b3": b3}                                    # [1, 1]


def _reference(x, params):
    h = jnp.maximum(x @ params["w1"].T + params["b1"].T, 0.0)
    h = jnp.maximum(h @ params["w2"].T + params["b2"].T, 0.0)
    return h @ params["w3"] + params["b3"]              # w3 is [l2, 1], b3 is [1, 1]


if __name__ == "__main__":
    key = jax.random.PRNGKey(0)
    k_x, k_p, k_x2 = jax.random.split(key, 3)

    l1, l2 = 32, 32
    params = init_params(k_p, l1, l2)

    # Small case: B=16 -> padded to one 128-lane block, grid=(1,)
    B = 16
    x = jax.random.normal(k_x, (B, 4), jnp.float32)
    out = jax.block_until_ready(net2_forward(x, params))
    assert out.shape == (B, 1)
    assert jnp.allclose(out, _reference(x, params), atol=1e-5, rtol=1e-5)

    # Ragged / multi-tile case: B=640 -> padded to 1024, tn=512, grid=(2,) ("parallel")
    B2 = 640
    x2 = jax.random.normal(k_x2, (B2, 4), jnp.float32)
    out2 = jax.block_until_ready(net2_forward(x2, params))
    assert out2.shape == (B2, 1)
    assert jnp.allclose(out2, _reference(x2, params), atol=1e-5, rtol=1e-5)

    print("KERNEL_OK")
</pallas_src>

<mosaic_0001>
module attributes {stable_mosaic.version = 11 : i64} {
  func.func @_mlp_kernel(%arg0: i32, %arg1: memref<4x128xf32, #tpu.memory_space<vmem>>, %arg2: memref<32x4xf32, #tpu.memory_space<vmem>>, %arg3: memref<32x1xf32, #tpu.memory_space<vmem>>, %arg4: memref<32x32xf32, #tpu.memory_space<vmem>>, %arg5: memref<32x1xf32, #tpu.memory_space<vmem>>, %arg6: memref<32x1xf32, #tpu.memory_space<vmem>>, %arg7: memref<1x1xf32, #tpu.memory_space<vmem>>, %arg8: memref<1x128xf32, #tpu.memory_space<vmem>>) attributes {dimension_semantics = [#tpu.dimension_semantics<parallel>], iteration_bounds = array<i64: 1>, scalar_prefetch = 0 : i64, scratch_operands = 0 : i64, tpu.core_type = #tpu.core_type<tc>, window_params = [{transform_indices = @transform_0, window_bounds = array<i64: 4, 128>}, {pipeline_mode = #tpu.pipeline_mode<synchronous>, transform_indices = @transform_1, window_bounds = array<i64: 32, 4>}, {pipeline_mode = #tpu.pipeline_mode<synchronous>, transform_indices = @transform_2, window_bounds = array<i64: 32, 1>}, {pipeline_mode = #tpu.pipeline_mode<synchronous>, transform_indices = @transform_3, window_bounds = array<i64: 32, 32>}, {pipeline_mode = #tpu.pipeline_mode<synchronous>, transform_indices = @transform_4, window_bounds = array<i64: 32, 1>}, {pipeline_mode = #tpu.pipeline_mode<synchronous>, transform_indices = @transform_5, window_bounds = array<i64: 32, 1>}, {pipeline_mode = #tpu.pipeline_mode<synchronous>, transform_indices = @transform_6, window_bounds = array<i64: 1, 1>}, {transform_indices = @transform_7, window_bounds = array<i64: 1, 128>}]} {
    %c0 = arith.constant 0 : index
    %c0_0 = arith.constant 0 : index
    %0 = vector.load %arg1[%c0, %c0_0] : memref<4x128xf32, #tpu.memory_space<vmem>>, vector<4x128xf32>
    %c0_1 = arith.constant 0 : index
    %c0_2 = arith.constant 0 : index
    %1 = vector.load %arg2[%c0_1, %c0_2] : memref<32x4xf32, #tpu.memory_space<vmem>>, vector<32x4xf32>
    %2 = vector.extract_strided_slice %1 {offsets = [0, 0], sizes = [32, 1], strides = [1, 1]} : vector<32x4xf32> to vector<32x1xf32>
    %3 = vector.extract_strided_slice %0 {offsets = [0, 0], sizes = [1, 128], strides = [1, 1]} : vector<4x128xf32> to vector<1x128xf32>
    %4 = vector.broadcast %2 : vector<32x1xf32> to vector<32x128xf32>
    %5 = vector.broadcast %3 : vector<1x128xf32> to vector<32x128xf32>
    %6 = arith.mulf %4, %5 : vector<32x128xf32>
    %7 = vector.extract_strided_slice %1 {offsets = [0, 1], sizes = [32, 1], strides = [1, 1]} : vector<32x4xf32> to vector<32x1xf32>
    %8 = vector.extract_strided_slice %0 {offsets = [1, 0], sizes = [1, 128], strides = [1, 1]} : vector<4x128xf32> to vector<1x128xf32>
    %9 = vector.broadcast %7 : vector<32x1xf32> to vector<32x128xf32>
    %10 = vector.broadcast %8 : vector<1x128xf32> to vector<32x128xf32>
    %11 = arith.mulf %9, %10 : vector<32x128xf32>
    %12 = arith.addf %6, %11 : vector<32x128xf32>
    %13 = vector.extract_strided_slice %1 {offsets = [0, 2], sizes = [32, 1], strides = [1, 1]} : vector<32x4xf32> to vector<32x1xf32>
    %14 = vector.extract_strided_slice %0 {offsets = [2, 0], sizes = [1, 128], strides = [1, 1]} : vector<4x128xf32> to vector<1x128xf32>
    %15 = vector.broadcast %13 : vector<32x1xf32> to vector<32x128xf32>
    %16 = vector.broadcast %14 : vector<1x128xf32> to vector<32x128xf32>
    %17 = arith.mulf %15, %16 : vector<32x128xf32>
    %18 = arith.addf %12, %17 : vector<32x128xf32>
    %19 = vector.extract_strided_slice %1 {offsets = [0, 3], sizes = [32, 1], strides = [1, 1]} : vector<32x4xf32> to vector<32x1xf32>
    %20 = vector.extract_strided_slice %0 {offsets = [3, 0], sizes = [1, 128], strides = [1, 1]} : vector<4x128xf32> to vector<1x128xf32>
    %21 = vector.broadcast %19 : vector<32x1xf32> to vector<32x128xf32>
    %22 = vector.broadcast %20 : vector<1x128xf32> to vector<32x128xf32>
    %23 = arith.mulf %21, %22 : vector<32x128xf32>
    %24 = arith.addf %18, %23 : vector<32x128xf32>
    %c0_3 = arith.constant 0 : index
    %c0_4 = arith.constant 0 : index
    %25 = vector.load %arg3[%c0_3, %c0_4] : memref<32x1xf32, #tpu.memory_space<vmem>>, vector<32x1xf32>
    %26 = vector.broadcast %25 : vector<32x1xf32> to vector<32x128xf32>
    %27 = arith.addf %24, %26 : vector<32x128xf32>
    %cst = arith.constant 0.000000e+00 : f32
    %28 = vector.broadcast %cst : f32 to vector<32x128xf32>
    %29 = arith.maximumf %27, %28 : vector<32x128xf32>
    %c0_5 = arith.constant 0 : index
    %c0_6 = arith.constant 0 : index
    %30 = vector.load %arg4[%c0_5, %c0_6] : memref<32x32xf32, #tpu.memory_space<vmem>>, vector<32x32xf32>
    %cst_7 = arith.constant dense<0.000000e+00> : vector<32x128xf32>
    %31 = tpu.matmul %30, %29, %cst_7 {dimension_numbers = #tpu.dot_dimension_numbers<[1], [0], [0], [1], [0, 0, 1, 1], [], []>} : vector<32x32xf32>, vector<32x128xf32>, vector<32x128xf32> -> vector<32x128xf32>
    %c0_8 = arith.constant 0 : index
    %c0_9 = arith.constant 0 : index
    %32 = vector.load %arg5[%c0_8, %c0_9] : memref<32x1xf32, #tpu.memory_space<vmem>>, vector<32x1xf32>
    %33 = vector.broadcast %32 : vector<32x1xf32> to vector<32x128xf32>
    %34 = arith.addf %31, %33 : vector<32x128xf32>
    %cst_10 = arith.constant 0.000000e+00 : f32
    %35 = vector.broadcast %cst_10 : f32 to vector<32x128xf32>
    %36 = arith.maximumf %34, %35 : vector<32x128xf32>
    %c0_11 = arith.constant 0 : index
    %c0_12 = arith.constant 0 : index
    %37 = vector.load %arg6[%c0_11, %c0_12] : memref<32x1xf32, #tpu.memory_space<vmem>>, vector<32x1xf32>
    %38 = vector.broadcast %37 : vector<32x1xf32> to vector<32x128xf32>
    %39 = arith.mulf %36, %38 : vector<32x128xf32>
    %cst_13 = arith.constant dense<0.000000e+00> : vector<128xf32>
    %40 = vector.multi_reduction <add>, %39, %cst_13 [0] : vector<32x128xf32> to vector<128xf32>
    %41 = vector.shape_cast %40 : vector<128xf32> to vector<1x128xf32>
    %c0_14 = arith.constant 0 : index
    %c0_15 = arith.constant 0 : index
    %42 = vector.load %arg7[%c0_14, %c0_15] : memref<1x1xf32, #tpu.memory_space<vmem>>, vector<1x1xf32>
    %43 = vector.broadcast %42 : vector<1x1xf32> to vector<1x128xf32>
    %44 = arith.addf %41, %43 : vector<1x128xf32>
    %c0_16 = arith.constant 0 : index
    %c0_17 = arith.constant 0 : index
    %45 = vector.load %arg8[%c0_16, %c0_17] : memref<1x128xf32, #tpu.memory_space<vmem>>, vector<1x128xf32>
    tpu.vector_store %arg8[%c0_16, %c0_17], %44 {strides = array<i32>} : memref<1x128xf32, #tpu.memory_space<vmem>>, vector<1x128xf32>,
    return
  }
  func.func @transform_0(%arg0: i32) -> (i32, i32) {
    %c0_i32 = arith.constant 0 : i32
    %c0_i32_0 = arith.constant 0 : i32
    return %c0_i32, %arg0 : i32, i32
  }
  func.func @transform_1(%arg0: i32) -> (i32, i32) {
    %c0_i32 = arith.constant 0 : i32
    %c0_i32_0 = arith.constant 0 : i32
    %c0_i32_1 = arith.constant 0 : i32
    return %c0_i32, %c0_i32_0 : i32, i32
  }
  func.func @transform_2(%arg0: i32) -> (i32, i32) {
    %c0_i32 = arith.constant 0 : i32
    %c0_i32_0 = arith.constant 0 : i32
    %c0_i32_1 = arith.constant 0 : i32
    return %c0_i32, %c0_i32_0 : i32, i32
  }
  func.func @transform_3(%arg0: i32) -> (i32, i32) {
    %c0_i32 = arith.constant 0 : i32
    %c0_i32_0 = arith.constant 0 : i32
    %c0_i32_1 = arith.constant 0 : i32
    return %c0_i32, %c0_i32_0 : i32, i32
  }
  func.func @transform_4(%arg0: i32) -> (i32, i32) {
    %c0_i32 = arith.constant 0 : i32
    %c0_i32_0 = arith.constant 0 : i32
    %c0_i32_1 = arith.constant 0 : i32
    return %c0_i32, %c0_i32_0 : i32, i32
  }
  func.func @transform_5(%arg0: i32) -> (i32, i32) {
    %c0_i32 = arith.constant 0 : i32
    %c0_i32_0 = arith.constant 0 : i32
    %c0_i32_1 = arith.constant 0 : i32
    return %c0_i32, %c0_i32_0 : i32, i32
  }
  func.func @transform_6(%arg0: i32) -> (i32, i32) {
    %c0_i32 = arith.constant 0 : i32
    %c0_i32_0 = arith.constant 0 : i32
    %c0_i32_1 = arith.constant 0 : i32
    return %c0_i32, %c0_i32_0 : i32, i32
  }
  func.func @transform_7(%arg0: i32) -> (i32, i32) {
    %c0_i32 = arith.constant 0 : i32
    %c0_i32_0 = arith.constant 0 : i32
    return %c0_i32, %arg0 : i32, i32
  }
}

</mosaic_0001>

<llo_original>
// kernel: tpu_custom_call.1
$region0: #{tpu_custom_call.1}
  #allocation0 [shape = 'u32[]', space=smem, size = 0x4, offset = 0x4, fixed_abs, tag = 'smem constant byte address 0x4 - core index']
  #allocation1 [shape = 'u32[144,128]{1,0:T(1,128)}', space=vmem, size = 0x12000, scoped, tag = 'internal scratch']
  #allocation2 [shape = 'f32[1,1]{1,0:T(1,128)S(1)}', space=vmem, size = 0x200, scoped, tag = 'scoped memory for tpu_custom_call.1']
  %s0 = inlined_call_operand.vmem [shape: f32[4,128], index: 0, kind: input, shape index: {}]
  %s1 = inlined_call_operand.vmem [shape: f32[32,4], index: 1, kind: input, shape index: {}]
  %s2 = inlined_call_operand.vmem [shape: f32[32,1], index: 2, kind: input, shape index: {}]
  %s3 = inlined_call_operand.vmem [shape: f32[32,32], index: 3, kind: input, shape index: {}]
  %s4 = inlined_call_operand.vmem [shape: f32[32,1], index: 4, kind: input, shape index: {}]
  %s5 = inlined_call_operand.vmem [shape: f32[32,1], index: 5, kind: input, shape index: {}]
  %s6 = inlined_call_operand.<no memory space> [shape: f32[1,1], index: 6, kind: input, shape index: {}]
  %s7 = inlined_call_operand.hbm [shape: f32[1,128], index: 7, kind: output, shape index: {}]
  %s8 = sld [smem:[#allocation0]]
  $region38: #{tpu_custom_call.1} parent=0
    _
  %s10 = ssub.s32 1, %s8
  %s11 = scalar_select 0, %s10, %s8
  %v12 = vstv %s6
  %13 = vst [vmem:[#allocation2] sm:$0x1] %v12
  $region1: #{tpu_custom_call.1} parent=0
    #allocation3 [shape = 'u8[512]{0}', space=vmem, size = 0x400, scoped, tag = 'output window, operand 0, single buffered']
    #allocation4 [shape = 's32[1]{0}', space=sflag, size = 0x4, scoped, tag = 'scoped memory for tpu_custom_call.1']
    %14 = vsyncpa [#allocation4], 0
    // Predicated region
    $region2: #{tpu_custom_call.1} parent=1 // pred_check
      _
    $region3: #{tpu_custom_call.1} parent=1 // pred_check_branch
      %16 = sbr.rel (0) target = $region5
    $region4: #{tpu_custom_call.1} parent=1 // pred_region
      _
    $region5: #{tpu_custom_call.1} parent=1 // pred_fallthru
      _
    // Predicated region
    $region6: #{tpu_custom_call.1} parent=1 // pred_check
      _
    $region7: #{tpu_custom_call.1} parent=1 // pred_check_branch
      %18 = sbr.rel (0) target = $region9
    $region8: #{tpu_custom_call.1} parent=1 // pred_region
      _
    $region9: #{tpu_custom_call.1} parent=1 // pred_fallthru
      _
    // Predicated region
    $region10: #{tpu_custom_call.1} parent=1 // pred_check
      _
    $region11: #{tpu_custom_call.1} parent=1 // pred_check_branch
      %20 = sbr.rel (0) target = $region13
    $region12: #{tpu_custom_call.1} parent=1 // pred_region
      _
    $region13: #{tpu_custom_call.1} parent=1 // pred_fallthru
      _
    // Predicated region
    $region14: #{tpu_custom_call.1} parent=1 // pred_check
      _
    $region15: #{tpu_custom_call.1} parent=1 // pred_check_branch
      %22 = sbr.rel (0) target = $region17
    $region16: #{tpu_custom_call.1} parent=1 // pred_region
      _
    $region17: #{tpu_custom_call.1} parent=1 // pred_fallthru
      _
    // Predicated region
    $region18: #{tpu_custom_call.1} parent=1 // pred_check
      _
    $region19: #{tpu_custom_call.1} parent=1 // pred_check_branch
      %24 = sbr.rel (0) target = $region21
    $region20: #{tpu_custom_call.1} parent=1 // pred_region
      _
    $region21: #{tpu_custom_call.1} parent=1 // pred_fallthru
      _
    // Predicated region
    $region22: #{tpu_custom_call.1} parent=1 // pred_check
      _
    $region23: #{tpu_custom_call.1} parent=1 // pred_check_branch
      %26 = sbr.rel (0) target = $region25
    $region24: #{tpu_custom_call.1} parent=1 // pred_region
      _
    $region25: #{tpu_custom_call.1} parent=1 // pred_fallthru
      _
    // Predicated region
    $region26: #{tpu_custom_call.1} parent=1 // pred_check
      _
    $region27: #{tpu_custom_call.1} parent=1 // pred_check_branch
      %28 = sbr.rel (0) target = $region29
    $region28: #{tpu_custom_call.1} parent=1 // pred_region
      _
    $region29: #{tpu_custom_call.1} parent=1 // pred_fallthru
      _
    %v29 = vld [vmem:[%s0] sm:$0xf]
    %v30 = vld [vmem:[%s1] sm:$0xff]
    %v31 = vld [vmem:[%s1 + $0x8] sm:$0xff]
    %v32 = vld [vmem:[%s1 + $0x10] sm:$0xff]
    %v33 = vld [vmem:[%s1 + $0x18] sm:$0xff]
    %35 = vset.pattern.permute.xlu0 0
    %36 = vperm.xlu0 %35, %v30
    %v37 = vpop.permute.xlu0 %36
    %40 = vset.pattern.permute.xlu0 0
    %41 = vperm.xlu0 %40, %v31
    %v42 = vpop.permute.xlu0 %41
    %45 = vset.pattern.permute.xlu0 0
    %46 = vperm.xlu0 %45, %v32
    %v47 = vpop.permute.xlu0 %46
    %50 = vset.pattern.permute.xlu0 0
    %51 = vperm.xlu0 %50, %v33
    %v52 = vpop.permute.xlu0 %51
    %v54 = vlaneseq
    %v55 = vshrl.u32 %v54, 7
    %v56 = vsub.s32 0, %v55
    %v57 = vrot.slane %v29, %v56
    %v58 = vmul.f32 %v37, %v57
    %v59 = vmul.f32 %v42, %v57
    %v60 = vmul.f32 %v47, %v57
    %v61 = vmul.f32 %v52, %v57
    %62 = vset.pattern.permute.xlu0 1
    %63 = vperm.xlu0 %62, %v30
    %v64 = vpop.permute.xlu0 %63
    %66 = vset.pattern.permute.xlu0 1
    %67 = vperm.xlu0 %66, %v31
    %v68 = vpop.permute.xlu0 %67
    %70 = vset.pattern.permute.xlu0 1
    %71 = vperm.xlu0 %70, %v32
    %v72 = vpop.permute.xlu0 %71
    %74 = vset.pattern.permute.xlu0 1
    %75 = vperm.xlu0 %74, %v33
    %v76 = vpop.permute.xlu0 %75
    %v78 = vlaneseq
    %v79 = vshrl.u32 %v78, 7
    %v80 = vsub.s32 1, %v79
    %v81 = vrot.slane %v29, %v80
    %v82 = vmul.f32 %v64, %v81
    %v83 = vmul.f32 %v68, %v81
    %v84 = vmul.f32 %v72, %v81
    %v85 = vmul.f32 %v76, %v81
    %v86 = vadd.f32 %v58, %v82
    %v87 = vadd.f32 %v59, %v83
    %v88 = vadd.f32 %v60, %v84
    %v89 = vadd.f32 %v61, %v85
    %90 = vset.pattern.permute.xlu0 2
    %91 = vperm.xlu0 %90, %v30
    %v92 = vpop.permute.xlu0 %91
    %94 = vset.pattern.permute.xlu0 2
    %95 = vperm.xlu0 %94, %v31
    %v96 = vpop.permute.xlu0 %95
    %98 = vset.pattern.permute.xlu0 2
    %99 = vperm.xlu0 %98, %v32
    %v100 = vpop.permute.xlu0 %99
    %102 = vset.pattern.permute.xlu0 2
    %103 = vperm.xlu0 %102, %v33
    %v104 = vpop.permute.xlu0 %103
    %v106 = vlaneseq
    %v107 = vshrl.u32 %v106, 7
    %v108 = vsub.s32 2, %v107
    %v109 = vrot.slane %v29, %v108
    %v110 = vmul.f32 %v92, %v109
    %v111 = vmul.f32 %v96, %v109
    %v112 = vmul.f32 %v100, %v109
    %v113 = vmul.f32 %v104, %v109
    %v114 = vadd.f32 %v86, %v110
    %v115 = vadd.f32 %v87, %v111
    %v116 = vadd.f32 %v88, %v112
    %v117 = vadd.f32 %v89, %v113
    %118 = vset.pattern.permute.xlu0 3
    %119 = vperm.xlu0 %118, %v30
    %v120 = vpop.permute.xlu0 %119
    %122 = vset.pattern.permute.xlu0 3
    %123 = vperm.xlu0 %122, %v31
    %v124 = vpop.permute.xlu0 %123
    %126 = vset.pattern.permute.xlu0 3
    %127 = vperm.xlu0 %126, %v32
    %v128 = vpop.permute.xlu0 %127
    %130 = vset.pattern.permute.xlu0 3
    %131 = vperm.xlu0 %130, %v33
    %v132 = vpop.permute.xlu0 %131
    %v134 = vlaneseq
    %v135 = vshrl.u32 %v134, 7
    %v136 = vsub.s32 3, %v135
    %v137 = vrot.slane %v29, %v136
    %v138 = vmul.f32 %v120, %v137
    %v139 = vmul.f32 %v124, %v137
    %v140 = vmul.f32 %v128, %v137
    %v141 = vmul.f32 %v132, %v137
    %v142 = vadd.f32 %v114, %v138
    %v143 = vadd.f32 %v115, %v139
    %v144 = vadd.f32 %v116, %v140
    %v145 = vadd.f32 %v117, %v141
    %v146 = vld [vmem:[%s2] sm:$0xff]
    %v147 = vld [vmem:[%s2 + $0x8] sm:$0xff]
    %v148 = vld [vmem:[%s2 + $0x10] sm:$0xff]
    %v149 = vld [vmem:[%s2 + $0x18] sm:$0xff]
    %151 = vset.pattern.permute.xlu0 0
    %152 = vperm.xlu0 %151, %v146
    %v153 = vpop.permute.xlu0 %152
    %156 = vset.pattern.permute.xlu0 0
    %157 = vperm.xlu0 %156, %v147
    %v158 = vpop.permute.xlu0 %157
    %161 = vset.pattern.permute.xlu0 0
    %162 = vperm.xlu0 %161, %v148
    %v163 = vpop.permute.xlu0 %162
    %166 = vset.pattern.permute.xlu0 0
    %167 = vperm.xlu0 %166, %v149
    %v168 = vpop.permute.xlu0 %167
    %v170 = vadd.f32 %v142, %v153
    %v171 = vadd.f32 %v143, %v158
    %v172 = vadd.f32 %v144, %v163
    %v173 = vadd.f32 %v145, %v168
    %v174 = vmax.f32 %v170, 0.0
    %v175 = vmax.f32 %v171, 0.0
    %v176 = vmax.f32 %v172, 0.0
    %v177 = vmax.f32 %v173, 0.0
    %v178 = vld [vmem:[%s3] sm:$0xff]
    %v179 = vld [vmem:[%s3 + $0x8] sm:$0xff]
    %v180 = vld [vmem:[%s3 + $0x10] sm:$0xff]
    %v181 = vld [vmem:[%s3 + $0x18] sm:$0xff]
    %v182 = vld [vmem:[%s4] sm:$0xff]
    %v183 = vld [vmem:[%s4 + $0x8] sm:$0xff]
    %v184 = vld [vmem:[%s4 + $0x10] sm:$0xff]
    %v185 = vld [vmem:[%s4 + $0x18] sm:$0xff]
    %187 = vset.pattern.permute.xlu0 0
    %188 = vperm.xlu0 %187, %v182
    %v189 = vpop.permute.xlu0 %188
    %192 = vset.pattern.permute.xlu0 0
    %193 = vperm.xlu0 %192, %v183
    %v194 = vpop.permute.xlu0 %193
    %197 = vset.pattern.permute.xlu0 0
    %198 = vperm.xlu0 %197, %v184
    %v199 = vpop.permute.xlu0 %198
    %202 = vset.pattern.permute.xlu0 0
    %203 = vperm.xlu0 %202, %v185
    %v204 = vpop.permute.xlu0 %203
    %vm206 = vcmask 261120
    %v208 = vsel %vm206, %v178, 0
    %v211 = vsel %vm206, %v179, 0
    %v214 = vsel %vm206, %v180, 0
    %v217 = vsel %vm206, %v181, 0
    %219 = vmatprep.subr.mxu0 0.0
    %220 = vmatpush1.msra.mxu0 %v174
    %221 = vmatprep.subr.mxu0 0.0
    %222 = vmatpush1.msra.mxu0 %v175
    %223 = vmatprep.subr.mxu0 0.0
    %224 = vmatpush1.msra.mxu0 %v176
    %225 = vmatprep.subr.mxu0 0.0
    %226 = vmatpush1.msra.mxu0 %v177
    %227 = vmatprep.subr.mxu0 0.0
    %228 = vmatpush1.msra.mxu0 0.0
    %229 = vmatprep.subr.mxu0 0.0
    %230 = vmatpush1.msra.mxu0 0.0
    %231 = vmatprep.subr.mxu0 0.0
    %232 = vmatpush1.msra.mxu0 0.0
    %233 = vmatprep.subr.mxu0 0.0
    %234 = vmatpush1.msra.mxu0 0.0
    %235 = vmatprep.subr.mxu0 0.0
    %236 = vmatpush1.msra.mxu0 0.0
    %237 = vmatprep.subr.mxu0 0.0
    %238 = vmatpush1.msra.mxu0 0.0
    %239 = vmatprep.subr.mxu0 0.0
    %240 = vmatpush1.msra.mxu0 0.0
    %241 = vmatprep.subr.mxu0 0.0
    %242 = vmatpush1.msra.mxu0 0.0
    %243 = vmatprep.subr.mxu0 0.0
    %244 = vmatpush1.msra.mxu0 0.0
    %245 = vmatprep.subr.mxu0 0.0
    %246 = vmatpush1.msra.mxu0 0.0
    %247 = vmatprep.subr.mxu0 0.0
    %248 = vmatpush1.msra.mxu0 0.0
    %249 = vmatprep.subr.mxu0 0.0
    %250 = vmatpush1.msra.mxu0 0.0
    %251 = vmatprep.subr.mxu0 0.0
    %252 = vmatpush1.msra.mxu0 0.0
    %253 = vmatprep.subr.mxu0 0.0
    %254 = vmatpush1.msra.mxu0 0.0
    %255 = vmatprep.subr.mxu0 0.0
    %256 = vmatpush1.msra.mxu0 0.0
    %257 = vmatprep.subr.mxu0 0.0
    %258 = vmatpush1.msra.mxu0 0.0
    %259 = vmatprep.subr.mxu0 0.0
    %260 = vmatpush1.msra.mxu0 0.0
    %261 = vmatprep.subr.mxu0 0.0
    %262 = vmatpush1.msra.mxu0 0.0
    %263 = vmatprep.subr.mxu0 0.0
    %264 = vmatpush1.msra.mxu0 0.0
    %265 = vmatprep.subr.mxu0 0.0
    %266 = vmatpush1.msra.mxu0 0.0
    %267 = vmatprep.subr.mxu0 0.0
    %268 = vmatpush1.msra.mxu0 0.0
    %269 = vmatprep.subr.mxu0 0.0
    %270 = vmatpush1.msra.mxu0 0.0
    %271 = vmatprep.subr.mxu0 0.0
    %272 = vmatpush1.msra.mxu0 0.0
    %273 = vmatprep.subr.mxu0 0.0
    %274 = vmatpush1.msra.mxu0 0.0
    %275 = vmatprep.subr.mxu0 0.0
    %276 = vmatpush1.msra.mxu0 0.0
    %277 = vmatprep.subr.mxu0 0.0
    %278 = vmatpush1.msra.mxu0 0.0
    %279 = vmatprep.subr.mxu0 0.0
    %280 = vmatpush1.msra.mxu0 0.0
    %281 = vmatprep.subr.mxu0 0.0
    %282 = vmatpush1.msra.mxu0 0.0
    %283 = vmatprep.mubr.f32.mxu0 0.0
    %284 = vmatmul.mubr.f32.gmra.mrb[0].mxu0 %v208
    %v285 = vpop.f32.mrb[0].mxu0
    %v286 = vadd.f32 %v189, %v285
    %v287 = vpop.f32.mrb[0].mxu0
    %288 = vmatprep.mubr.f32.mxu0 0.0
    %289 = vmatmul.mubr.f32.gmra.mrb[0].mxu0 %v211
    %v290 = vpop.f32.mrb[0].mxu0
    %v291 = vadd.f32 %v194, %v290
    %v292 = vpop.f32.mrb[0].mxu0
    %293 = vmatprep.mubr.f32.mxu0 0.0
    %294 = vmatmul.mubr.f32.gmra.mrb[0].mxu0 %v214
    %v295 = vpop.f32.mrb[0].mxu0
    %v296 = vadd.f32 %v199, %v295
    %v297 = vpop.f32.mrb[0].mxu0
    %298 = vmatprep.mubr.f32.mxu0 0.0
    %299 = vmatmul.mubr.f32.gmra.mrb[0].mxu0 %v217
    %v300 = vpop.f32.mrb[0].mxu0
    %v301 = vadd.f32 %v204, %v300
    %v302 = vpop.f32.mrb[0].mxu0
    %303 = vdwg.mxu0
    %v304 = vmax.f32 %v286, 0.0
    %v305 = vmax.f32 %v291, 0.0
    %v306 = vmax.f32 %v296, 0.0
    %v307 = vmax.f32 %v301, 0.0
    %v308 = vld [vmem:[%s5] sm:$0xff]
    %v309 = vld [vmem:[%s5 + $0x8] sm:$0xff]
    %v310 = vld [vmem:[%s5 + $0x10] sm:$0xff]
    %v311 = vld [vmem:[%s5 + $0x18] sm:$0xff]
    %313 = vset.pattern.permute.xlu0 0
    %314 = vperm.xlu0 %313, %v308
    %v315 = vpop.permute.xlu0 %314
    %318 = vset.pattern.permute.xlu0 0
    %319 = vperm.xlu0 %318, %v309
    %v320 = vpop.permute.xlu0 %319
    %323 = vset.pattern.permute.xlu0 0
    %324 = vperm.xlu0 %323, %v310
    %v325 = vpop.permute.xlu0 %324
    %328 = vset.pattern.permute.xlu0 0
    %329 = vperm.xlu0 %328, %v311
    %v330 = vpop.permute.xlu0 %329
    %v332 = vmul.f32 %v304, %v315
    %v333 = vmul.f32 %v305, %v320
    %v334 = vmul.f32 %v306, %v325
    %v335 = vmul.f32 %v307, %v330
    %v336 = vadd.f32 %v332, %v333
    %v337 = vadd.f32 %v336, %v334
    %v338 = vadd.f32 %v337, %v335
    %v339 = vrot.slane %v338, 4
    %v340 = vadd.f32 %v338, %v339
    %v341 = vrot.slane %v340, 2
    %v342 = vadd.f32 %v340, %v341
    %v343 = vrot.slane %v342, 1
    %v344 = vadd.f32 %v342, %v343
    %v345 = vld [vmem:[#allocation2] sm:$0x1]
    %347 = vset.pattern.permute.xlu0 0
    %348 = vperm.xlu0 %347, %v345
    %v349 = vpop.permute.xlu0 %348
    %v351 = vlaneseq
    %v352 = vshrl.u32 %v351, 7
    %v353 = vsub.s32 0, %v352
    %v354 = vrot.slane %v349, %v353
    %v355 = vadd.f32 %v344, %v354
    %356 = vst [vmem:[#allocation3] sm:$0x1] %v355
    // Predicated region
    $region30: #{tpu_custom_call.1} parent=1 // pred_check
      _
    $region31: #{tpu_custom_call.1} parent=1 // pred_check_branch
      %358 = sbr.rel (0) target = $region33
    $region32: #{tpu_custom_call.1} parent=1 // pred_region
      %s360 = ssub.s32 16, 16
      %361 = vsyncadd [#allocation4], %s360
      %s363 = sshll.u32 [#allocation3], 4
      %s364 = int_to_ptr.vmem [resolvable:$true] %s363
      %366 = dma.vmem_to_hbm [thread:$0]  %s364, 16, %s7, [#allocation4]
    $region33: #{tpu_custom_call.1} parent=1 // pred_fallthru
      _
    // Predicated region
    $region34: #{tpu_custom_call.1} parent=1 // pred_check
      _
    $region35: #{tpu_custom_call.1} parent=1 // pred_check_branch
      %368 = sbr.rel (0) target = $region37
    $region36: #{tpu_custom_call.1} parent=1 // pred_region
      %369 = dma.done [#allocation4], 16
    $region37: #{tpu_custom_call.1} parent=1 // pred_fallthru
      _
    %370 = vsyncpa [#allocation4], 1

</llo_original>
